<compile_context>
chip_gen: v6e
topology: v6e:2x2x1
jax: 0.10.0
libtpu: 0.0.40
codegen_flags: <defaults>
</compile_context>

<pallas_src>
import jax
import jax.numpy as jnp
from jax.experimental import pallas as pl
from jax.experimental.pallas import tpu as pltpu


def _affine_kernel(wb_ref, x_ref, o_ref):
    # wb_ref: (2,) f32 in SMEM -> [weight, bias]. Cast to the tile dtype so the
    # elementwise math stays in x's dtype (no f32 promotion for bf16 tiles).
    w = wb_ref[0].astype(o_ref.dtype)
    b = wb_ref[1].astype(o_ref.dtype)
    o_ref[...] = x_ref[...] * w + b


def _to_2d(x: jax.Array) -> jax.Array:
    """Reshape x into a lane-dense 2-D slab (elementwise op -> any layout is OK)."""
    n = int(x.size)
    if n % 128 == 0 and n > 0:
        # Largest lane width from a fixed candidate list that divides the total
        # element count; 128 always divides here, so this always succeeds.
        for cols in (2048, 1024, 512, 256, 128):
            if n % cols == 0:
                return x.reshape(n // cols, cols)
    # Fallback for awkward sizes: keep the original last dim as the lane axis
    # (full-dim blocks are always legal, even if < 128 wide).
    if x.ndim == 0:
        return x.reshape(1, 1)
    if x.ndim == 1:
        return x.reshape(1, x.shape[0])
    return x.reshape(-1, x.shape[-1])


def _pick_block(rows: int, cols: int, itemsize: int):
    """Pick a ~<=2 MiB VMEM block with a lane-dense last dim.

    2 MiB/block keeps default double-buffering of input+output (~4x block bytes)
    under v5e's 16 MiB scoped default while hitting ~85%+ of HBM roofline for
    f32 elementwise work on v6e/v7x.
    """
    budget_bytes = 2 * 1024 * 1024
    # Lane (last) dim: keep full if modest or unaligned (full-dim block is always
    # legal); otherwise the largest multiple of 128 <= 2048 dividing cols.
    if cols <= 2048 or cols % 128 != 0:
        tile_c = cols
    else:
        tile_c = 2048
        while cols % tile_c != 0:
            tile_c -= 128
    # Sublane dim: fill the byte budget; multiple of 8 unless it is the full dim.
    max_r = max(1, budget_bytes // max(1, tile_c * itemsize))
    if rows <= max_r:
        tile_r = rows
    else:
        tile_r = max(8, (max_r // 8) * 8)
    return tile_r, tile_c


def linear_regression_forward(x: jax.Array, weight: jax.Array, bias: jax.Array) -> jax.Array:
    """y = weight * x + bias, scalar weight/bias broadcast over x (PyTorch semantics)."""
    orig_shape = x.shape
    if x.size == 0:
        # Nothing to compute; preserve shape/dtype.
        return x

    x2 = _to_2d(x)
    rows, cols = x2.shape

    tile_r, tile_c = _pick_block(rows, cols, x2.dtype.itemsize)
    grid = (pl.cdiv(rows, tile_r), pl.cdiv(cols, tile_c))

    # Pack the two scalars into one SMEM array; kept f32 (SMEM-friendly), cast in-kernel.
    wb = jnp.concatenate(
        [jnp.reshape(weight, (1,)), jnp.reshape(bias, (1,))]
    ).astype(jnp.float32)

    y2 = pl.pallas_call(
        _affine_kernel,
        out_shape=jax.ShapeDtypeStruct((rows, cols), x2.dtype),
        grid=grid,
        in_specs=[
            pl.BlockSpec(memory_space=pltpu.SMEM),                # packed (weight, bias)
            pl.BlockSpec((tile_r, tile_c), lambda i, j: (i, j)),  # x tile
        ],
        out_specs=pl.BlockSpec((tile_r, tile_c), lambda i, j: (i, j)),
        compiler_params=pltpu.CompilerParams(
            dimension_semantics=("parallel", "parallel"),
        ),
    )(wb, x2)
    return y2.reshape(orig_shape)


if __name__ == "__main__":
    key = jax.random.PRNGKey(0)
    k_w, k_b, k_x = jax.random.split(key, 3)

    # Deterministic "parameters" matching torch.rand(1) shapes.
    weight = jax.random.uniform(k_w, (1,), dtype=jnp.float32)
    bias = jax.random.uniform(k_b, (1,), dtype=jnp.float32)

    # Small input consistent with the forward (scalar w/b broadcast over any shape).
    x = jax.random.normal(k_x, (2, 4, 16, 16), dtype=jnp.float32)

    y = linear_regression_forward(x, weight, bias)
    y = jax.block_until_ready(y)

    # Reference check against plain JAX (same semantics as the PyTorch forward).
    y_ref = weight[0] * x + bias[0]
    assert y.shape == x.shape and y.dtype == x.dtype
    assert jnp.allclose(y, y_ref, atol=1e-6, rtol=1e-6), "mismatch vs reference"

    print("KERNEL_OK")
</pallas_src>

<mosaic_0001>
module attributes {stable_mosaic.version = 11 : i64} {
  func.func @_affine_kernel(%arg0: i32, %arg1: i32, %arg2: memref<2xf32, #tpu.memory_space<smem>>, %arg3: memref<1x2048xf32, #tpu.memory_space<vmem>>, %arg4: memref<1x2048xf32, #tpu.memory_space<vmem>>) attributes {dimension_semantics = [#tpu.dimension_semantics<parallel>, #tpu.dimension_semantics<parallel>], iteration_bounds = array<i64: 1, 1>, scalar_prefetch = 0 : i64, scratch_operands = 0 : i64, tpu.core_type = #tpu.core_type<tc>, window_params = [{transform_indices = @transform_0, window_bounds = array<i64: 2>}, {transform_indices = @transform_1, window_bounds = array<i64: 1, 2048>}, {transform_indices = @transform_2, window_bounds = array<i64: 1, 2048>}]} {
    %c0 = arith.constant 0 : index
    %0 = memref.load %arg2[%c0] : memref<2xf32, #tpu.memory_space<smem>>
    %c1 = arith.constant 1 : index
    %1 = memref.load %arg2[%c1] : memref<2xf32, #tpu.memory_space<smem>>
    %c0_0 = arith.constant 0 : index
    %c0_1 = arith.constant 0 : index
    %2 = vector.load %arg3[%c0_0, %c0_1] : memref<1x2048xf32, #tpu.memory_space<vmem>>, vector<1x2048xf32>
    %3 = vector.broadcast %0 : f32 to vector<1x2048xf32>
    %4 = arith.mulf %2, %3 : vector<1x2048xf32>
    %5 = vector.broadcast %1 : f32 to vector<1x2048xf32>
    %6 = arith.addf %4, %5 : vector<1x2048xf32>
    %c0_2 = arith.constant 0 : index
    %c0_3 = arith.constant 0 : index
    %7 = vector.load %arg4[%c0_2, %c0_3] : memref<1x2048xf32, #tpu.memory_space<vmem>>, vector<1x2048xf32>
    tpu.vector_store %arg4[%c0_2, %c0_3], %6 {strides = array<i32>} : memref<1x2048xf32, #tpu.memory_space<vmem>>, vector<1x2048xf32>,
    return
  }
  func.func @transform_0(%arg0: i32, %arg1: i32) -> i32 {
    %c0_i32 = arith.constant 0 : i32
    %c0_i32_0 = arith.constant 0 : i32
    return %c0_i32 : i32
  }
  func.func @transform_1(%arg0: i32, %arg1: i32) -> (i32, i32) {
    %c0_i32 = arith.constant 0 : i32
    return %arg0, %arg1 : i32, i32
  }
  func.func @transform_2(%arg0: i32, %arg1: i32) -> (i32, i32) {
    %c0_i32 = arith.constant 0 : i32
    return %arg0, %arg1 : i32, i32
  }
}

</mosaic_0001>

<llo_original>
// kernel: tpu_custom_call.1
$region0: #{tpu_custom_call.1}
  #allocation0 [shape = 'u32[]', space=smem, size = 0x4, offset = 0x4, fixed_abs, tag = 'smem constant byte address 0x4 - core index']
  #allocation1 [shape = 'u32[144,128]{1,0:T(1,128)}', space=vmem, size = 0x12000, scoped, tag = 'internal scratch']
  %s0 = inlined_call_operand.hbm [shape: f32[2], index: 0, kind: input, shape index: {}]
  %s1 = inlined_call_operand.hbm [shape: f32[1,2048], index: 1, kind: input, shape index: {}]
  %s2 = inlined_call_operand.hbm [shape: f32[1,2048], index: 2, kind: output, shape index: {}]
  %s3 = sld [smem:[#allocation0]]
  $region26: #{tpu_custom_call.1} parent=0
    _
  %s5 = ssub.s32 1, %s3
  %s6 = scalar_select 0, %s5, %s3
  $region1: #{tpu_custom_call.1} parent=0
    #allocation2 [shape = 'u8[512]{0}', space=smem, size = 0x200, scoped, tag = 'input window, operand 0, single buffered']
    #allocation3 [shape = 's32[1]{0}', space=sflag, size = 0x4, scoped, tag = 'scoped memory for tpu_custom_call.1']
    #allocation4 [shape = 's32[1]{0}', space=sflag, size = 0x4, scoped, tag = 'scoped memory for tpu_custom_call.1']
    #allocation5 [shape = 's32[1]{0}', space=sflag, size = 0x4, scoped, tag = 'scoped memory for tpu_custom_call.1']
    #allocation6 [shape = 'u8[8192]{0}', space=vmem, size = 0x2000, scoped, tag = 'input window, operand 1, single buffered']
    #allocation7 [shape = 'u8[8192]{0}', space=vmem, size = 0x2000, scoped, tag = 'output window, operand 0, single buffered']
    %7 = vsyncpa [#allocation5], 0
    %8 = vsyncpa [#allocation3], 0
    %9 = vsyncpa [#allocation4], 0
    // Predicated region
    $region2: #{tpu_custom_call.1} parent=1 // pred_check
      _
    $region3: #{tpu_custom_call.1} parent=1 // pred_check_branch
      %11 = sbr.rel (0) target = $region5
    $region4: #{tpu_custom_call.1} parent=1 // pred_region
      %s13 = ssub.s32 16, 16
      %14 = vsyncadd [#allocation5], %s13
      %17 = dma.hbm_to_smem %s0, 16, [#allocation2], [#allocation5]
    $region5: #{tpu_custom_call.1} parent=1 // pred_fallthru
      _
    // Predicated region
    $region6: #{tpu_custom_call.1} parent=1 // pred_check
      _
    $region7: #{tpu_custom_call.1} parent=1 // pred_check_branch
      %19 = sbr.rel (0) target = $region9
    $region8: #{tpu_custom_call.1} parent=1 // pred_region
      %s21 = ssub.s32 256, 256
      %22 = vsyncadd [#allocation3], %s21
      %s24 = sshll.u32 [#allocation6], 4
      %s25 = int_to_ptr.vmem [resolvable:$true] %s24
      %27 = dma.hbm_to_vmem [thread:$0]  %s1, 256, %s25, [#allocation3]
    $region9: #{tpu_custom_call.1} parent=1 // pred_fallthru
      _
    // Predicated region
    $region10: #{tpu_custom_call.1} parent=1 // pred_check
      _
    $region11: #{tpu_custom_call.1} parent=1 // pred_check_branch
      %29 = sbr.rel (0) target = $region13
    $region12: #{tpu_custom_call.1} parent=1 // pred_region
      %30 = dma.done [#allocation5], 16
    $region13: #{tpu_custom_call.1} parent=1 // pred_fallthru
      _
    // Predicated region
    $region14: #{tpu_custom_call.1} parent=1 // pred_check
      _
    $region15: #{tpu_custom_call.1} parent=1 // pred_check_branch
      %32 = sbr.rel (0) target = $region17
    $region16: #{tpu_custom_call.1} parent=1 // pred_region
      %33 = dma.done [#allocation3], 256
    $region17: #{tpu_custom_call.1} parent=1 // pred_fallthru
      _
    %34 = sfence
    %s35 = sld [smem:[#allocation2]]
    %s36 = sld [smem:[#allocation2 + $0x1]]
    %v37 = vld [vmem:[#allocation6] sm:$0xff]
    %v38 = vld [vmem:[#allocation6 + $0x8] sm:$0xff]
    %v39 = vstv %s35
    %v40 = vmul.f32 %v37, %v39
    %v41 = vmul.f32 %v38, %v39
    %v42 = vstv %s36
    %v43 = vadd.f32 %v40, %v42
    %v44 = vadd.f32 %v41, %v42
    %45 = vst [vmem:[#allocation7] sm:$0xff] %v43
    %46 = vst [vmem:[#allocation7 + $0x8] sm:$0xff] %v44
    // Predicated region
    $region18: #{tpu_custom_call.1} parent=1 // pred_check
      _
    $region19: #{tpu_custom_call.1} parent=1 // pred_check_branch
      %48 = sbr.rel (0) target = $region21
    $region20: #{tpu_custom_call.1} parent=1 // pred_region
      %s50 = ssub.s32 256, 256
      %51 = vsyncadd [#allocation4], %s50
      %s53 = sshll.u32 [#allocation7], 4
      %s54 = int_to_ptr.vmem [resolvable:$true] %s53
      %56 = dma.vmem_to_hbm [thread:$0]  %s54, 256, %s2, [#allocation4]
    $region21: #{tpu_custom_call.1} parent=1 // pred_fallthru
      _
    // Predicated region
    $region22: #{tpu_custom_call.1} parent=1 // pred_check
      _
    $region23: #{tpu_custom_call.1} parent=1 // pred_check_branch
      %58 = sbr.rel (0) target = $region25
    $region24: #{tpu_custom_call.1} parent=1 // pred_region
      %59 = dma.done [#allocation4], 256
    $region25: #{tpu_custom_call.1} parent=1 // pred_fallthru
      _
    %60 = vsyncpa [#allocation3], 1
    %61 = vsyncpa [#allocation4], 1
    %62 = vsyncpa [#allocation5], 1

</llo_original>
